<compile_context>
chip_gen: v6e
topology: v6e:2x2x1
jax: 0.10.0
libtpu: 0.0.40
codegen_flags: <defaults>
</compile_context>

<pallas_src>
import jax
import jax.numpy as jnp
from jax.experimental import pallas as pl
from jax.experimental.pallas import tpu as pltpu


def _round_up(x: int, m: int) -> int:
    return (x + m - 1) // m * m


def _linear_add_kernel(x_ref, w_ref, b_ref, other_ref, out_ref, v1_ref):
    # x_ref:     (tn, 1)  VMEM   (re-used across the M grid axis)
    # w_ref:     (1, 1)   SMEM   (Linear weight; in=out=1 -> scalar)
    # b_ref:     (1, 1)   SMEM   (Linear bias)
    # other_ref: (1, tm)  VMEM
    # out_ref:   (tn, tm) VMEM
    # v1_ref:    (tn, 1)  VMEM scratch, persists across grid steps
    @pl.when(pl.program_id(1) == 0)
    def _():
        # nn.Linear(1, 1): scalar multiply-add, computed once per N-tile.
        v1_ref[...] = x_ref[...] * w_ref[0, 0] + b_ref[0, 0]

    # Broadcast (tn, 1) + (1, tm) -> (tn, tm); lane-dense store.
    out_ref[...] = v1_ref[...] + other_ref[...]


def model_forward(x, other, weight, bias, *, max_tile_n=256, max_tile_m=1024):
    """x: (N,) or (N,1) f32, other: (M,) f32, weight: (1,1), bias: (1,) -> (N, M) f32."""
    x = jnp.asarray(x, jnp.float32).reshape(-1, 1)
    other = jnp.asarray(other, jnp.float32)
    N = x.shape[0]
    M = other.shape[0]

    # Tile sizes: sublane-aligned (8) on N, lane-aligned (128) on M.
    tn = min(max_tile_n, _round_up(N, 8))
    tm = min(max_tile_m, _round_up(M, 128))
    n_pad = _round_up(N, tn)
    m_pad = _round_up(M, tm)

    x_p = jnp.pad(x, ((0, n_pad - N), (0, 0)))
    other_p = jnp.pad(other, (0, m_pad - M)).reshape(1, m_pad)
    w2d = jnp.asarray(weight, jnp.float32).reshape(1, 1)   # (out=1, in=1)
    b2d = jnp.asarray(bias, jnp.float32).reshape(1, 1)

    grid = (n_pad // tn, m_pad // tm)

    out_p = pl.pallas_call(
        _linear_add_kernel,
        out_shape=jax.ShapeDtypeStruct((n_pad, m_pad), jnp.float32),
        grid_spec=pltpu.PrefetchScalarGridSpec(
            num_scalar_prefetch=0,
            grid=grid,
            in_specs=[
                # x: depends only on the N tile; M index ignored -> no re-DMA per M tile.
                pl.BlockSpec((tn, 1), lambda n, m: (n, 0)),
                # weight / bias: tiny scalars, kept in SMEM.
                pl.BlockSpec((1, 1), lambda n, m: (0, 0),
                             memory_space=pltpu.MemorySpace.SMEM),
                pl.BlockSpec((1, 1), lambda n, m: (0, 0),
                             memory_space=pltpu.MemorySpace.SMEM),
                # other: depends only on the M tile.
                pl.BlockSpec((1, tm), lambda n, m: (0, m)),
            ],
            out_specs=pl.BlockSpec((tn, tm), lambda n, m: (n, m)),
            scratch_shapes=[pltpu.VMEM((tn, 1), jnp.float32)],
        ),
        compiler_params=pltpu.CompilerParams(
            # N axis independent -> parallel (megacore on v7x);
            # M axis kept sequential so the pl.when(m==0) hoist is valid.
            dimension_semantics=("parallel", "arbitrary"),
        ),
    )(x_p, w2d, b2d, other_p)

    return out_p[:N, :M]


if __name__ == "__main__":
    key = jax.random.PRNGKey(0)
    k_x, k_w, k_b, k_x2 = jax.random.split(key, 4)

    # Shapes consistent with the original script:
    #   input = torch.randn(10)  -> 10 samples of in_size=1
    #   other = torch.arange(100).float() -> (100,)
    N, M = 10, 100
    x = jax.random.normal(k_x, (N,), dtype=jnp.float32)
    other = jnp.arange(M, dtype=jnp.float32)

    # Deterministic nn.Linear(1, 1) parameters (synthetic, not a checkpoint).
    weight = jax.random.normal(k_w, (1, 1), dtype=jnp.float32)  # (out, in)
    bias = jax.random.normal(k_b, (1,), dtype=jnp.float32)

    out = model_forward(x, other, weight, bias)
    out = jax.block_until_ready(out)

    # Pure-JAX reference of the PyTorch forward.
    ref = (x.reshape(-1, 1) @ weight.T + bias) + other[None, :]
    assert out.shape == (N, M)
    assert jnp.allclose(out, ref, atol=1e-6, rtol=1e-6)

    # Second, larger check that exercises the multi-tile grid + padding path.
    N2, M2 = 300, 2000
    x2 = jax.random.normal(k_x2, (N2,), dtype=jnp.float32)
    other2 = jnp.arange(M2, dtype=jnp.float32) * 0.125
    out2 = jax.block_until_ready(model_forward(x2, other2, weight, bias))
    ref2 = (x2.reshape(-1, 1) @ weight.T + bias) + other2[None, :]
    assert out2.shape == (N2, M2)
    assert jnp.allclose(out2, ref2, atol=1e-5, rtol=1e-5)

    print("KERNEL_OK")
</pallas_src>

<mosaic_0001>
module attributes {stable_mosaic.version = 11 : i64} {
  func.func @_linear_add_kernel(%arg0: i32, %arg1: i32, %arg2: memref<16x1xf32, #tpu.memory_space<vmem>>, %arg3: memref<1x1xf32, #tpu.memory_space<smem>>, %arg4: memref<1x1xf32, #tpu.memory_space<smem>>, %arg5: memref<1x128xf32, #tpu.memory_space<vmem>>, %arg6: memref<16x128xf32, #tpu.memory_space<vmem>>, %arg7: memref<16x1xf32, #tpu.memory_space<vmem>>) attributes {dimension_semantics = [#tpu.dimension_semantics<parallel>, #tpu.dimension_semantics<arbitrary>], iteration_bounds = array<i64: 1, 1>, scalar_prefetch = 0 : i64, scratch_operands = 1 : i64, tpu.core_type = #tpu.core_type<tc>, window_params = [{transform_indices = @transform_0, window_bounds = array<i64: 16, 1>}, {transform_indices = @transform_1, window_bounds = array<i64: 1, 1>}, {transform_indices = @transform_2, window_bounds = array<i64: 1, 1>}, {transform_indices = @transform_3, window_bounds = array<i64: 1, 128>}, {transform_indices = @transform_4, window_bounds = array<i64: 16, 128>}]} {
    %c0_i32 = arith.constant 0 : i32
    %0 = arith.cmpi eq, %arg1, %c0_i32 : i32
    %1 = arith.extui %0 : i1 to i32
    %c0_i32_0 = arith.constant 0 : i32
    %2 = arith.cmpi ne, %1, %c0_i32_0 : i32
    scf.if %2 {
      %c0_6 = arith.constant 0 : index
      %c0_7 = arith.constant 0 : index
      %9 = vector.load %arg2[%c0_6, %c0_7] : memref<16x1xf32, #tpu.memory_space<vmem>>, vector<16x1xf32>
      %c0_8 = arith.constant 0 : index
      %c0_9 = arith.constant 0 : index
      %10 = memref.load %arg3[%c0_8, %c0_9] : memref<1x1xf32, #tpu.memory_space<smem>>
      %11 = vector.broadcast %10 : f32 to vector<16x1xf32>
      %12 = arith.mulf %9, %11 : vector<16x1xf32>
      %c0_10 = arith.constant 0 : index
      %c0_11 = arith.constant 0 : index
      %13 = memref.load %arg4[%c0_10, %c0_11] : memref<1x1xf32, #tpu.memory_space<smem>>
      %14 = vector.broadcast %13 : f32 to vector<16x1xf32>
      %15 = arith.addf %12, %14 : vector<16x1xf32>
      %c0_12 = arith.constant 0 : index
      %c0_13 = arith.constant 0 : index
      %16 = vector.load %arg7[%c0_12, %c0_13] : memref<16x1xf32, #tpu.memory_space<vmem>>, vector<16x1xf32>
      tpu.vector_store %arg7[%c0_12, %c0_13], %15 {strides = array<i32>} : memref<16x1xf32, #tpu.memory_space<vmem>>, vector<16x1xf32>,
    } else {
    }
    %c0 = arith.constant 0 : index
    %c0_1 = arith.constant 0 : index
    %3 = vector.load %arg7[%c0, %c0_1] : memref<16x1xf32, #tpu.memory_space<vmem>>, vector<16x1xf32>
    %c0_2 = arith.constant 0 : index
    %c0_3 = arith.constant 0 : index
    %4 = vector.load %arg5[%c0_2, %c0_3] : memref<1x128xf32, #tpu.memory_space<vmem>>, vector<1x128xf32>
    %5 = vector.broadcast %3 : vector<16x1xf32> to vector<16x128xf32>
    %6 = vector.broadcast %4 : vector<1x128xf32> to vector<16x128xf32>
    %7 = arith.addf %5, %6 : vector<16x128xf32>
    %c0_4 = arith.constant 0 : index
    %c0_5 = arith.constant 0 : index
    %8 = vector.load %arg6[%c0_4, %c0_5] : memref<16x128xf32, #tpu.memory_space<vmem>>, vector<16x128xf32>
    tpu.vector_store %arg6[%c0_4, %c0_5], %7 {strides = array<i32>} : memref<16x128xf32, #tpu.memory_space<vmem>>, vector<16x128xf32>,
    return
  }
  func.func @transform_0(%arg0: i32, %arg1: i32) -> (i32, i32) {
    %c0_i32 = arith.constant 0 : i32
    %c0_i32_0 = arith.constant 0 : i32
    return %arg0, %c0_i32 : i32, i32
  }
  func.func @transform_1(%arg0: i32, %arg1: i32) -> (i32, i32) {
    %c0_i32 = arith.constant 0 : i32
    %c0_i32_0 = arith.constant 0 : i32
    %c0_i32_1 = arith.constant 0 : i32
    return %c0_i32, %c0_i32_0 : i32, i32
  }
  func.func @transform_2(%arg0: i32, %arg1: i32) -> (i32, i32) {
    %c0_i32 = arith.constant 0 : i32
    %c0_i32_0 = arith.constant 0 : i32
    %c0_i32_1 = arith.constant 0 : i32
    return %c0_i32, %c0_i32_0 : i32, i32
  }
  func.func @transform_3(%arg0: i32, %arg1: i32) -> (i32, i32) {
    %c0_i32 = arith.constant 0 : i32
    %c0_i32_0 = arith.constant 0 : i32
    return %c0_i32, %arg1 : i32, i32
  }
  func.func @transform_4(%arg0: i32, %arg1: i32) -> (i32, i32) {
    %c0_i32 = arith.constant 0 : i32
    return %arg0, %arg1 : i32, i32
  }
}

</mosaic_0001>

<llo_original>
// kernel: tpu_custom_call.1
$region0: #{tpu_custom_call.1}
  #allocation0 [shape = 'u32[]', space=smem, size = 0x4, offset = 0x4, fixed_abs, tag = 'smem constant byte address 0x4 - core index']
  #allocation1 [shape = 'u32[144,128]{1,0:T(1,128)}', space=vmem, size = 0x12000, scoped, tag = 'internal scratch']
  #allocation2 [shape = 'f32[16,1]{1,0:T(8,128)}', space=vmem, size = 0x2000, scoped, tag = 'scratch operand']
  #allocation3 [shape = 'f32[1,1]{1,0:T(1,128)S(6)}', space=smem, size = 0x200, scoped, tag = 'scoped memory for tpu_custom_call.1']
  #allocation4 [shape = 'f32[1,1]{1,0:T(1,128)S(6)}', space=smem, size = 0x200, scoped, tag = 'scoped memory for tpu_custom_call.1']
  %s0 = inlined_call_operand.vmem [shape: f32[16,1], index: 0, kind: input, shape index: {}]
  %s1 = inlined_call_operand.<no memory space> [shape: f32[1,1], index: 1, kind: input, shape index: {}]
  %s2 = inlined_call_operand.<no memory space> [shape: f32[1,1], index: 2, kind: input, shape index: {}]
  %s3 = inlined_call_operand.vmem [shape: f32[1,128], index: 3, kind: input, shape index: {}]
  %s4 = inlined_call_operand.hbm [shape: f32[16,128], index: 4, kind: output, shape index: {}]
  %s5 = sld [smem:[#allocation0]]
  $region30: #{tpu_custom_call.1} parent=0
    _
  %s7 = ssub.s32 1, %s5
  %s8 = scalar_select 0, %s7, %s5
  %9 = sst [smem:[#allocation3]] %s1
  %10 = sst [smem:[#allocation4]] %s2
  $region1: #{tpu_custom_call.1} parent=0
    #allocation5 [shape = 'u8[8192]{0}', space=vmem, size = 0x2000, scoped, tag = 'output window, operand 0, single buffered']
    #allocation6 [shape = 's32[1]{0}', space=sflag, size = 0x4, scoped, tag = 'scoped memory for tpu_custom_call.1']
    %11 = vsyncpa [#allocation6], 0
    // Predicated region
    $region2: #{tpu_custom_call.1} parent=1 // pred_check
      _
    $region3: #{tpu_custom_call.1} parent=1 // pred_check_branch
      %13 = sbr.rel (0) target = $region5
    $region4: #{tpu_custom_call.1} parent=1 // pred_region
      _
    $region5: #{tpu_custom_call.1} parent=1 // pred_fallthru
      _
    // Predicated region
    $region6: #{tpu_custom_call.1} parent=1 // pred_check
      _
    $region7: #{tpu_custom_call.1} parent=1 // pred_check_branch
      %15 = sbr.rel (0) target = $region9
    $region8: #{tpu_custom_call.1} parent=1 // pred_region
      _
    $region9: #{tpu_custom_call.1} parent=1 // pred_fallthru
      _
    // Predicated region
    $region10: #{tpu_custom_call.1} parent=1 // pred_check
      _
    $region11: #{tpu_custom_call.1} parent=1 // pred_check_branch
      %17 = sbr.rel (0) target = $region13
    $region12: #{tpu_custom_call.1} parent=1 // pred_region
      _
    $region13: #{tpu_custom_call.1} parent=1 // pred_fallthru
      _
    // Predicated region
    $region14: #{tpu_custom_call.1} parent=1 // pred_check
      _
    $region15: #{tpu_custom_call.1} parent=1 // pred_check_branch
      %19 = sbr.rel (0) target = $region17
    $region16: #{tpu_custom_call.1} parent=1 // pred_region
      _
    $region17: #{tpu_custom_call.1} parent=1 // pred_fallthru
      _
    %p20 = scmp.eq.s32.totalorder 0, 0
    // Predicated region
    $region18: #{tpu_custom_call.1} parent=1 // pred_check
      %p21 = pneg %p20
    $region19: #{tpu_custom_call.1} parent=1 // pred_check_branch
      %23 = sbr.rel (%p21) target = $region21
    $region20: #{tpu_custom_call.1} parent=1 // pred_region
      %v24 = vld [vmem:[%s0] sm:$0xff]
      %v25 = vld [vmem:[%s0 + $0x8] sm:$0xff]
      %s26 = sld [smem:[#allocation3]]
      %v27 = vstv %s26
      %v28 = vmul.f32 %v24, %v27
      %v29 = vmul.f32 %v25, %v27
      %s30 = sld [smem:[#allocation4]]
      %v31 = vstv %s30
      %v32 = vadd.f32 %v28, %v31
      %v33 = vadd.f32 %v29, %v31
      %vm34 = vcmask 7168
      %35 = vst.msk [vmem:[#allocation2] sm:$0xff] %vm34, %v32
      %36 = vst.msk [vmem:[#allocation2 + $0x8] sm:$0xff] %vm34, %v33
    $region21: #{tpu_custom_call.1} parent=1 // pred_fallthru
      _
    %v37 = vld [vmem:[#allocation2] sm:$0xff]
    %v38 = vld [vmem:[#allocation2 + $0x8] sm:$0xff]
    %v39 = vld [vmem:[%s3] sm:$0x1]
    %41 = vset.pattern.permute.xlu0 0
    %42 = vperm.xlu0 %41, %v37
    %v43 = vpop.permute.xlu0 %42
    %46 = vset.pattern.permute.xlu0 0
    %47 = vperm.xlu0 %46, %v38
    %v48 = vpop.permute.xlu0 %47
    %v51 = vlaneseq
    %v52 = vshrl.u32 %v51, 7
    %v53 = vsub.s32 0, %v52
    %v54 = vrot.slane %v39, %v53
    %v56 = vadd.f32 %v43, %v54
    %v57 = vadd.f32 %v48, %v54
    %58 = vst [vmem:[#allocation5] sm:$0xff] %v56
    %59 = vst [vmem:[#allocation5 + $0x8] sm:$0xff] %v57
    // Predicated region
    $region22: #{tpu_custom_call.1} parent=1 // pred_check
      _
    $region23: #{tpu_custom_call.1} parent=1 // pred_check_branch
      %61 = sbr.rel (0) target = $region25
    $region24: #{tpu_custom_call.1} parent=1 // pred_region
      %s63 = ssub.s32 256, 256
      %64 = vsyncadd [#allocation6], %s63
      %s65 = sshll.u32 [#allocation5], 4
      %s66 = int_to_ptr.vmem [resolvable:$true] %s65
      %71 = dma.vmem_to_hbm [thread:$0]  %s66, 256, %s4, [#allocation6], 128, 128, 8
    $region25: #{tpu_custom_call.1} parent=1 // pred_fallthru
      _
    // Predicated region
    $region26: #{tpu_custom_call.1} parent=1 // pred_check
      _
    $region27: #{tpu_custom_call.1} parent=1 // pred_check_branch
      %73 = sbr.rel (0) target = $region29
    $region28: #{tpu_custom_call.1} parent=1 // pred_region
      %74 = dma.done [#allocation6], 256
    $region29: #{tpu_custom_call.1} parent=1 // pred_fallthru
      _
    %75 = vsyncpa [#allocation6], 1

</llo_original>
